<compile_context>
chip_gen: v5e
topology: v5e:2x2
jax: 0.10.0
libtpu: 0.0.40
codegen_flags: <defaults>
</compile_context>

<pallas_src>
import functools

import jax
import jax.numpy as jnp
from jax.experimental import pallas as pl
from jax.experimental.pallas import tpu as pltpu


def _round_up(a, b):
    return ((a + b - 1) // b) * b


def _router_kernel(num_experts, top_k, x_ref, w_ref, b_ref, noise_ref,
                   probs_ref, idx_ref):
    E = num_experts

    # Stream f32 x, cast to bf16 in-register (VPU, avoids a wrapper HBM pass),
    # one fused MXU matmul for both linear layers with f32 accumulation.
    x = x_ref[...].astype(jnp.bfloat16)                              # (TM, D)
    y = jnp.dot(x, w_ref[...], preferred_element_type=jnp.float32)   # (TM, 2E)
    y = y + b_ref[...]                                               # + (1, 2E)

    # One small XLU transpose so the whole epilogue runs tokens-on-lanes.
    y = y.T                                                          # (2E, TM)
    logits = y[:E, :]                                                # (E, TM)
    noise_logits = y[E:, :]                                          # (E, TM)

    # softplus(noise_logits), numerically stable (exp/log only).
    sp = jnp.maximum(noise_logits, 0.0) + jnp.log(1.0 + jnp.exp(-jnp.abs(noise_logits)))

    # noisy_logits = logits + randn * softplus(noise_logits)
    # TODO(synk): the standard-normal noise could be drawn in-kernel with
    # pltpu.prng_seed + pltpu.prng_random_bits to drop this HBM stream.
    noisy = logits + noise_ref[...] * sp                             # (E, TM)

    TM = noisy.shape[1]
    expert_iota = jax.lax.broadcasted_iota(jnp.int32, (E, TM), 0)
    neg_inf = jnp.float32(-jnp.inf)

    # Iterative top-k (top_k is a small static int): per step take the column
    # max over experts (sublane reduction), pick the first (lowest index)
    # occurrence, mask it out.  Selection order == torch.topk (descending).
    work = noisy
    selected = jnp.zeros((E, TM), dtype=jnp.bool_)
    row_max = None
    sels = []
    for k in range(top_k):
        m = jnp.max(work, axis=0, keepdims=True)                     # (1, TM)
        if k == 0:
            row_max = m                                              # stable softmax
        cand = jnp.where(work == m, expert_iota, E)
        sel = jnp.min(cand, axis=0, keepdims=True)                   # (1, TM) i32
        sels.append(sel)
        onehot = expert_iota == sel
        selected = jnp.logical_or(selected, onehot)
        work = jnp.where(onehot, neg_inf, work)

    # softmax over (-inf except top-k) == exp(noisy - max) on selected lanes.
    # Exact normalization: the kernel is HBM-bound, the divide is free.
    ex = jnp.where(selected, jnp.exp(noisy - row_max), 0.0)          # (E, TM)
    denom = jnp.sum(ex, axis=0, keepdims=True)                       # (1, TM)
    probs_ref[...] = ex / denom

    # Expert indices, int32, row k = k-th choice.
    k_iota = jax.lax.broadcasted_iota(jnp.int32, (top_k, TM), 0)
    idx = jnp.zeros((top_k, TM), dtype=jnp.int32)
    for k in range(top_k):
        idx = jnp.where(k_iota == k, sels[k], idx)
    idx_ref[...] = idx


def _vmem_config():
    """(streaming-tile budget, scoped VMEM limit), generation aware with a
    v7x-safe fallback (64 MiB physical VMEM) when the query is unavailable."""
    cap = 64 * 1024 * 1024
    try:
        cap = int(getattr(pltpu.get_tpu_info(), "vmem_capacity_bytes", cap))
    except Exception:  # e.g. interpret mode on a non-TPU host
        pass
    budget = max(8 << 20, min(cap // 4, 48 << 20))
    limit = max(32 << 20, min(cap // 2, 64 << 20))
    return budget, limit


def _choose_tm(tokens, n_embed, num_experts, top_k, vmem_budget_bytes):
    """Token-tile: as large as the VMEM budget allows (fewer grid steps, bigger
    DMAs), multiple of 128 so tokens-on-lanes tiles are lane-dense, and >= 2
    grid steps for larger problems so both v7x TensorCores get work."""
    per_token = (2 * 4 * n_embed                      # x tile, f32, double-buffered
                 + 2 * 4 * num_experts                # noise tile, f32, double-buffered
                 + 2 * 4 * (num_experts + top_k)      # output tiles, double-buffered
                 + 8 * 4 * 2 * num_experts)           # in-kernel f32 temporaries
    tm_cap = max(128, min(2048, vmem_budget_bytes // per_token))
    tm_cap = (tm_cap // 128) * 128
    if tokens < 256:
        # Single block whose token-axis extent equals the full array extent:
        # always layout-legal, and too small to be worth splitting.
        return tokens
    return max(128, min(tm_cap, _round_up(pl.cdiv(tokens, 2), 128)))


def noisy_topk_router(x, w_route, b_route, w_noise, b_noise, noise_et, top_k, tm=None):
    """x: (B, S, D) f32; w_*: (E, D); b_*: (E,); noise_et: (E, B*S) std-normal.
    Returns (router_output (B, S, E) f32, indices (B, S, top_k) int32)."""
    B, S, D = x.shape
    E = w_route.shape[0]
    tokens = B * S

    vmem_budget, vmem_limit = _vmem_config()
    if tm is None:
        tm = _choose_tm(tokens, D, E, top_k, vmem_budget)

    # Metadata-only reshape; no padding, no wrapper-side dtype cast of x.
    x2 = x.reshape(tokens, D)

    # Fuse the two Linear layers: one (D, 2E) bf16 weight, one (1, 2E) f32 bias.
    w12 = jnp.concatenate([w_route.T, w_noise.T], axis=1).astype(jnp.bfloat16)
    b12 = jnp.concatenate([b_route, b_noise]).reshape(1, 2 * E).astype(jnp.float32)

    kernel = functools.partial(_router_kernel, E, top_k)
    grid = (pl.cdiv(tokens, tm),)

    probs_t, idx_t = pl.pallas_call(
        kernel,
        out_shape=(
            jax.ShapeDtypeStruct((E, tokens), jnp.float32),    # probs, tokens on lanes
            jax.ShapeDtypeStruct((top_k, tokens), jnp.int32),  # indices, tokens on lanes
        ),
        grid_spec=pltpu.PrefetchScalarGridSpec(
            num_scalar_prefetch=0,
            grid=grid,
            in_specs=[
                pl.BlockSpec((tm, D), lambda i: (i, 0)),        # x (f32)
                pl.BlockSpec((D, 2 * E), lambda i: (0, 0)),     # fused weights (bf16, resident)
                pl.BlockSpec((1, 2 * E), lambda i: (0, 0)),     # fused bias (f32, resident)
                pl.BlockSpec((E, tm), lambda i: (0, i)),        # standard-normal noise (f32)
            ],
            out_specs=[
                pl.BlockSpec((E, tm), lambda i: (0, i)),
                pl.BlockSpec((top_k, tm), lambda i: (0, i)),
            ],
        ),
        compiler_params=pltpu.CompilerParams(
            dimension_semantics=("parallel",),   # shards the token grid across v7x's 2 TCs
            vmem_limit_bytes=vmem_limit,
        ),
    )(x2, w12, b12, noise_et)

    # Layout plumbing back to the module's token-major outputs (tiny arrays).
    router_output = probs_t.T.reshape(B, S, E)
    indices = idx_t.T.reshape(B, S, top_k)
    return router_output, indices


def _reference(x, w_route, b_route, w_noise, b_noise, noise_et, top_k):
    """Pure-JAX reference using the same bf16-cast matmul inputs as the kernel."""
    D = x.shape[-1]
    E = w_route.shape[0]
    xt = x.reshape(-1, D).astype(jnp.bfloat16).astype(jnp.float32)
    wr = w_route.astype(jnp.bfloat16).astype(jnp.float32)
    wn = w_noise.astype(jnp.bfloat16).astype(jnp.float32)
    logits = xt @ wr.T + b_route
    noise_logits = xt @ wn.T + b_noise
    sp = jnp.maximum(noise_logits, 0.0) + jnp.log(1.0 + jnp.exp(-jnp.abs(noise_logits)))
    noisy = logits + noise_et.T * sp
    _, top_idx = jax.lax.top_k(noisy, top_k)
    mask = (top_idx[:, :, None] == jnp.arange(E)[None, None, :]).any(axis=1)
    sparse = jnp.where(mask, noisy, -jnp.inf)
    probs = jax.nn.softmax(sparse, axis=-1)
    return probs, top_idx


if __name__ == "__main__":
    # Small shapes consistent with the module: (batch, seq, n_embed) tokens.
    B, S, D = 2, 8, 32
    E, TOP_K = 8, 2

    key = jax.random.PRNGKey(0)
    kx, kw1, kb1, kw2, kb2, kn = jax.random.split(key, 6)

    x = jax.random.normal(kx, (B, S, D), dtype=jnp.float32)

    # Deterministic Linear-style init (uniform +-1/sqrt(n_embed)).
    bound = 1.0 / (D ** 0.5)
    w_route = jax.random.uniform(kw1, (E, D), jnp.float32, -bound, bound)
    b_route = jax.random.uniform(kb1, (E,), jnp.float32, -bound, bound)
    w_noise = jax.random.uniform(kw2, (E, D), jnp.float32, -bound, bound)
    b_noise = jax.random.uniform(kb2, (E,), jnp.float32, -bound, bound)

    # torch.randn_like equivalent: i.i.d. standard normal, generated directly
    # in the (E, tokens) layout the kernel consumes (no transpose pass needed).
    noise_et = jax.random.normal(kn, (E, B * S), dtype=jnp.float32)

    router_output, indices = noisy_topk_router(
        x, w_route, b_route, w_noise, b_noise, noise_et, TOP_K)
    jax.block_until_ready((router_output, indices))

    # Shapes/dtypes.
    assert router_output.shape == (B, S, E) and indices.shape == (B, S, TOP_K)
    assert router_output.dtype == jnp.float32 and indices.dtype == jnp.int32
    # Each row is a distribution over exactly top_k experts (exact normalization).
    assert bool(jnp.allclose(router_output.sum(-1), 1.0, atol=1e-4))
    positives = (router_output > 0).sum(-1)
    assert int(positives.min()) == TOP_K and int(positives.max()) == TOP_K
    assert int(indices.min()) >= 0 and int(indices.max()) < E
    # The reported experts carry all of the probability mass.
    gathered = jnp.take_along_axis(router_output, indices, axis=-1)
    assert bool(jnp.allclose(gathered.sum(-1), 1.0, atol=1e-4))
    # Matches a pure-JAX reference built from the same bf16-cast inputs.
    ref_probs, _ = _reference(x, w_route, b_route, w_noise, b_noise, noise_et, TOP_K)
    assert bool(jnp.allclose(router_output.reshape(-1, E), ref_probs, atol=2e-3))

    print("KERNEL_OK")
</pallas_src>

<mosaic_0001>
module attributes {stable_mosaic.version = 11 : i64} {
  func.func @_router_kernel(%arg0: i32, %arg1: memref<16x32xf32, #tpu.memory_space<vmem>>, %arg2: memref<32x16xbf16, #tpu.memory_space<vmem>>, %arg3: memref<1x16xf32, #tpu.memory_space<vmem>>, %arg4: memref<8x16xf32, #tpu.memory_space<vmem>>, %arg5: memref<8x16xf32, #tpu.memory_space<vmem>>, %arg6: memref<2x16xi32, #tpu.memory_space<vmem>>) attributes {dimension_semantics = [#tpu.dimension_semantics<parallel>], iteration_bounds = array<i64: 1>, scalar_prefetch = 0 : i64, scratch_operands = 0 : i64, tpu.core_type = #tpu.core_type<tc>, window_params = [{transform_indices = @transform_0, window_bounds = array<i64: 16, 32>}, {pipeline_mode = #tpu.pipeline_mode<synchronous>, transform_indices = @transform_1, window_bounds = array<i64: 32, 16>}, {pipeline_mode = #tpu.pipeline_mode<synchronous>, transform_indices = @transform_2, window_bounds = array<i64: 1, 16>}, {transform_indices = @transform_3, window_bounds = array<i64: 8, 16>}, {transform_indices = @transform_4, window_bounds = array<i64: 8, 16>}, {transform_indices = @transform_5, window_bounds = array<i64: 2, 16>}]} {
    %c0 = arith.constant 0 : index
    %c0_0 = arith.constant 0 : index
    %0 = vector.load %arg1[%c0, %c0_0] : memref<16x32xf32, #tpu.memory_space<vmem>>, vector<16x32xf32>
    %1 = arith.truncf %0 : vector<16x32xf32> to vector<16x32xbf16>
    %c0_1 = arith.constant 0 : index
    %c0_2 = arith.constant 0 : index
    %2 = vector.load %arg2[%c0_1, %c0_2] : memref<32x16xbf16, #tpu.memory_space<vmem>>, vector<32x16xbf16>
    %cst = arith.constant dense<0.000000e+00> : vector<16x16xf32>
    %3 = tpu.matmul %1, %2, %cst {dimension_numbers = #tpu.dot_dimension_numbers<[1], [0], [0], [1], [0, 0, 1, 1], [], []>} : vector<16x32xbf16>, vector<32x16xbf16>, vector<16x16xf32> -> vector<16x16xf32>
    %c0_3 = arith.constant 0 : index
    %c0_4 = arith.constant 0 : index
    %4 = vector.load %arg3[%c0_3, %c0_4] : memref<1x16xf32, #tpu.memory_space<vmem>>, vector<1x16xf32>
    %5 = vector.broadcast %4 : vector<1x16xf32> to vector<16x16xf32>
    %6 = arith.addf %3, %5 : vector<16x16xf32>
    %7 = tpu.transpose %6, [1, 0] : vector<16x16xf32> -> vector<16x16xf32>
    %8 = vector.extract_strided_slice %7 {offsets = [0, 0], sizes = [8, 16], strides = [1, 1]} : vector<16x16xf32> to vector<8x16xf32>
    %9 = vector.extract_strided_slice %7 {offsets = [8, 0], sizes = [8, 16], strides = [1, 1]} : vector<16x16xf32> to vector<8x16xf32>
    %cst_5 = arith.constant 0.000000e+00 : f32
    %10 = vector.broadcast %cst_5 : f32 to vector<8x16xf32>
    %11 = arith.maximumf %9, %10 : vector<8x16xf32>
    %12 = math.absf %9 : vector<8x16xf32>
    %cst_6 = arith.constant 0.000000e+00 : f32
    %13 = vector.broadcast %cst_6 : f32 to vector<8x16xf32>
    %14 = arith.subf %13, %12 : vector<8x16xf32>
    %15 = math.exp %14 : vector<8x16xf32>
    %cst_7 = arith.constant 1.000000e+00 : f32
    %16 = vector.broadcast %cst_7 : f32 to vector<8x16xf32>
    %17 = arith.addf %16, %15 : vector<8x16xf32>
    %18 = math.log %17 : vector<8x16xf32>
    %19 = arith.addf %11, %18 : vector<8x16xf32>
    %c0_8 = arith.constant 0 : index
    %c0_9 = arith.constant 0 : index
    %20 = vector.load %arg4[%c0_8, %c0_9] : memref<8x16xf32, #tpu.memory_space<vmem>>, vector<8x16xf32>
    %21 = arith.mulf %20, %19 : vector<8x16xf32>
    %22 = arith.addf %8, %21 : vector<8x16xf32>
    %23 = tpu.iota {dimensions = array<i32: 0>} : vector<8x16xi32>
    %false = arith.constant false
    %24 = vector.broadcast %false : i1 to vector<8x16xi1>
    %cst_10 = arith.constant dense<0xFF800000> : vector<16xf32>
    %25 = vector.multi_reduction <maximumf>, %22, %cst_10 [0] : vector<8x16xf32> to vector<16xf32>
    %26 = vector.shape_cast %25 : vector<16xf32> to vector<1x16xf32>
    %27 = vector.broadcast %26 : vector<1x16xf32> to vector<8x16xf32>
    %28 = arith.cmpf oeq, %22, %27 : vector<8x16xf32>
    %c8_i32 = arith.constant 8 : i32
    %29 = vector.broadcast %c8_i32 : i32 to vector<8x16xi32>
    %30 = arith.select %28, %23, %29 : vector<8x16xi1>, vector<8x16xi32>
    %cst_11 = arith.constant dense<2147483647> : vector<16xi32>
    %31 = vector.multi_reduction <minsi>, %30, %cst_11 [0] : vector<8x16xi32> to vector<16xi32>
    %32 = vector.shape_cast %31 : vector<16xi32> to vector<1x16xi32>
    %33 = vector.broadcast %32 : vector<1x16xi32> to vector<8x16xi32>
    %34 = arith.cmpi eq, %23, %33 : vector<8x16xi32>
    %35 = arith.ori %24, %34 : vector<8x16xi1>
    %cst_12 = arith.constant 0xFF800000 : f32
    %36 = vector.broadcast %cst_12 : f32 to vector<8x16xf32>
    %37 = arith.select %34, %36, %22 : vector<8x16xi1>, vector<8x16xf32>
    %cst_13 = arith.constant dense<0xFF800000> : vector<16xf32>
    %38 = vector.multi_reduction <maximumf>, %37, %cst_13 [0] : vector<8x16xf32> to vector<16xf32>
    %39 = vector.shape_cast %38 : vector<16xf32> to vector<1x16xf32>
    %40 = vector.broadcast %39 : vector<1x16xf32> to vector<8x16xf32>
    %41 = arith.cmpf oeq, %37, %40 : vector<8x16xf32>
    %c8_i32_14 = arith.constant 8 : i32
    %42 = vector.broadcast %c8_i32_14 : i32 to vector<8x16xi32>
    %43 = arith.select %41, %23, %42 : vector<8x16xi1>, vector<8x16xi32>
    %cst_15 = arith.constant dense<2147483647> : vector<16xi32>
    %44 = vector.multi_reduction <minsi>, %43, %cst_15 [0] : vector<8x16xi32> to vector<16xi32>
    %45 = vector.shape_cast %44 : vector<16xi32> to vector<1x16xi32>
    %46 = vector.broadcast %45 : vector<1x16xi32> to vector<8x16xi32>
    %47 = arith.cmpi eq, %23, %46 : vector<8x16xi32>
    %48 = arith.ori %35, %47 : vector<8x16xi1>
    %49 = vector.broadcast %26 : vector<1x16xf32> to vector<8x16xf32>
    %50 = arith.subf %22, %49 : vector<8x16xf32>
    %51 = math.exp %50 : vector<8x16xf32>
    %cst_16 = arith.constant 0.000000e+00 : f32
    %52 = vector.broadcast %cst_16 : f32 to vector<8x16xf32>
    %53 = arith.select %48, %51, %52 : vector<8x16xi1>, vector<8x16xf32>
    %cst_17 = arith.constant dense<0.000000e+00> : vector<16xf32>
    %54 = vector.multi_reduction <add>, %53, %cst_17 [0] : vector<8x16xf32> to vector<16xf32>
    %55 = vector.shape_cast %54 : vector<16xf32> to vector<1x16xf32>
    %56 = vector.broadcast %55 : vector<1x16xf32> to vector<8x16xf32>
    %57 = arith.divf %53, %56 : vector<8x16xf32>
    %c0_18 = arith.constant 0 : index
    %c0_19 = arith.constant 0 : index
    %58 = vector.load %arg5[%c0_18, %c0_19] : memref<8x16xf32, #tpu.memory_space<vmem>>, vector<8x16xf32>
    tpu.vector_store %arg5[%c0_18, %c0_19], %57 {strides = array<i32>} : memref<8x16xf32, #tpu.memory_space<vmem>>, vector<8x16xf32>,
    %59 = tpu.iota {dimensions = array<i32: 0>} : vector<2x16xi32>
    %c0_i32 = arith.constant 0 : i32
    %60 = vector.broadcast %c0_i32 : i32 to vector<2x16xi32>
    %c0_i32_20 = arith.constant 0 : i32
    %61 = vector.broadcast %c0_i32_20 : i32 to vector<2x16xi32>
    %62 = arith.cmpi eq, %59, %61 : vector<2x16xi32>
    %63 = vector.shape_cast %32 : vector<1x16xi32> to vector<1x16xi32>
    %64 = vector.broadcast %63 : vector<1x16xi32> to vector<2x16xi32>
    %65 = arith.select %62, %64, %60 : vector<2x16xi1>, vector<2x16xi32>
    %c1_i32 = arith.constant 1 : i32
    %66 = vector.broadcast %c1_i32 : i32 to vector<2x16xi32>
    %67 = arith.cmpi eq, %59, %66 : vector<2x16xi32>
    %68 = vector.shape_cast %45 : vector<1x16xi32> to vector<1x16xi32>
    %69 = vector.broadcast %68 : vector<1x16xi32> to vector<2x16xi32>
    %70 = arith.select %67, %69, %65 : vector<2x16xi1>, vector<2x16xi32>
    %c0_21 = arith.constant 0 : index
    %c0_22 = arith.constant 0 : index
    %71 = vector.load %arg6[%c0_21, %c0_22] : memref<2x16xi32, #tpu.memory_space<vmem>>, vector<2x16xi32>
    tpu.vector_store %arg6[%c0_21, %c0_22], %70 {strides = array<i32>} : memref<2x16xi32, #tpu.memory_space<vmem>>, vector<2x16xi32>,
    return
  }
  func.func @transform_0(%arg0: i32) -> (i32, i32) {
    %c0_i32 = arith.constant 0 : i32
    %c0_i32_0 = arith.constant 0 : i32
    return %arg0, %c0_i32 : i32, i32
  }
  func.func @transform_1(%arg0: i32) -> (i32, i32) {
    %c0_i32 = arith.constant 0 : i32
    %c0_i32_0 = arith.constant 0 : i32
    %c0_i32_1 = arith.constant 0 : i32
    return %c0_i32, %c0_i32_0 : i32, i32
  }
  func.func @transform_2(%arg0: i32) -> (i32, i32) {
    %c0_i32 = arith.constant 0 : i32
    %c0_i32_0 = arith.constant 0 : i32
    %c0_i32_1 = arith.constant 0 : i32
    return %c0_i32, %c0_i32_0 : i32, i32
  }
  func.func @transform_3(%arg0: i32) -> (i32, i32) {
    %c0_i32 = arith.constant 0 : i32
    %c0_i32_0 = arith.constant 0 : i32
    return %c0_i32, %arg0 : i32, i32
  }
  func.func @transform_4(%arg0: i32) -> (i32, i32) {
    %c0_i32 = arith.constant 0 : i32
    %c0_i32_0 = arith.constant 0 : i32
    return %c0_i32, %arg0 : i32, i32
  }
  func.func @transform_5(%arg0: i32) -> (i32, i32) {
    %c0_i32 = arith.constant 0 : i32
    %c0_i32_0 = arith.constant 0 : i32
    return %c0_i32, %arg0 : i32, i32
  }
}

</mosaic_0001>

<llo_original>
// kernel: tpu_custom_call.1
$region0: #{tpu_custom_call.1}
  #allocation0 [shape = 'u32[]', space=smem, size = 0x4, offset = 0x4, fixed_abs, tag = 'smem constant byte address 0x4 - core index']
  #allocation1 [shape = 'u32[72,128]{1,0:T(1,128)}', space=vmem, size = 0x9000, scoped, tag = 'internal scratch']
  %s0 = inlined_call_operand.vmem [shape: f32[16,32], index: 0, kind: input, shape index: {}]
  %s1 = inlined_call_operand.vmem [shape: bf16[32,16], index: 1, kind: input, shape index: {}]
  %s2 = inlined_call_operand.vmem [shape: f32[1,16], index: 2, kind: input, shape index: {}]
  %s3 = inlined_call_operand.vmem [shape: f32[8,16], index: 3, kind: input, shape index: {}]
  %s4 = inlined_call_operand.hbm [shape: f32[8,16], index: 4, kind: output, shape index: {0}]
  %s5 = inlined_call_operand.hbm [shape: s32[2,16], index: 5, kind: output, shape index: {1}]
  %6 = xla_tuple %s4, %s5
  %s7 = sld [smem:[#allocation0]]
  $region34: #{tpu_custom_call.1} parent=0
    _
  %s9 = ssub.s32 1, %s7
  %s10 = scalar_select 0, %s9, %s7
  $region1: #{tpu_custom_call.1} parent=0
    #allocation2 [shape = 'u8[4096]{0}', space=vmem, size = 0x1000, scoped, tag = 'output window, operand 0, single buffered']
    #allocation3 [shape = 's32[1]{0}', space=sflag, size = 0x4, scoped, tag = 'scoped memory for tpu_custom_call.1']
    #allocation4 [shape = 'u8[1024]{0}', space=vmem, size = 0x400, scoped, tag = 'output window, operand 1, single buffered']
    #allocation5 [shape = 's32[1]{0}', space=sflag, size = 0x4, scoped, tag = 'scoped memory for tpu_custom_call.1']
    %11 = vsyncpa [#allocation3], 0
    %12 = vsyncpa [#allocation5], 0
    // Predicated region
    $region2: #{tpu_custom_call.1} parent=1 // pred_check
      _
    $region3: #{tpu_custom_call.1} parent=1 // pred_check_branch
      %14 = sbr.rel (0) target = $region5
    $region4: #{tpu_custom_call.1} parent=1 // pred_region
      _
    $region5: #{tpu_custom_call.1} parent=1 // pred_fallthru
      _
    // Predicated region
    $region6: #{tpu_custom_call.1} parent=1 // pred_check
      _
    $region7: #{tpu_custom_call.1} parent=1 // pred_check_branch
      %16 = sbr.rel (0) target = $region9
    $region8: #{tpu_custom_call.1} parent=1 // pred_region
      _
    $region9: #{tpu_custom_call.1} parent=1 // pred_fallthru
      _
    // Predicated region
    $region10: #{tpu_custom_call.1} parent=1 // pred_check
      _
    $region11: #{tpu_custom_call.1} parent=1 // pred_check_branch
      %18 = sbr.rel (0) target = $region13
    $region12: #{tpu_custom_call.1} parent=1 // pred_region
      _
    $region13: #{tpu_custom_call.1} parent=1 // pred_fallthru
      _
    // Predicated region
    $region14: #{tpu_custom_call.1} parent=1 // pred_check
      _
    $region15: #{tpu_custom_call.1} parent=1 // pred_check_branch
      %20 = sbr.rel (0) target = $region17
    $region16: #{tpu_custom_call.1} parent=1 // pred_region
      _
    $region17: #{tpu_custom_call.1} parent=1 // pred_fallthru
      _
    %v22 = vld [vmem:[%s0] sm:$0xff]
    %v23 = vld [vmem:[%s0 + $0x8] sm:$0xff]
    %v24 = vpack.c.bf16 %v23, %v22
    %v25 = vld [vmem:[%s1] sm:$0xf]
    %v26 = vld [vmem:[%s1 + $0x4] sm:$0xf]
    %v27 = vld [vmem:[%s1 + $0x8] sm:$0xf]
    %v28 = vld [vmem:[%s1 + $0xc] sm:$0xf]
    %v29 = vld [vmem:[%s2] sm:$0x1]
    %v31 = vperm.slane %v29, 0
    %v37 = vunpack.c.l.b16 %v25
    %v38 = vunpack.c.l.b16 %v26
    %v39 = vunpack.c.l.b16 %v27
    %v40 = vunpack.c.l.b16 %v28
    %v41 = vpack.c.b16 %v38, %v37
    %v42 = vpack.c.b16 %v40, %v39
    %vm45 = vcmask 261120
    %v47 = vsel %vm45, %v24, 0
    %49 = vmatpush.bf16.msra.mxu0 0
    %50 = vmatpush.bf16.msra.mxu0 0
    %51 = vmatpush.bf16.msra.mxu0 0
    %52 = vmatpush.bf16.msra.mxu0 0
    %53 = vmatpush.bf16.msra.mxu0 0
    %54 = vmatpush.bf16.msra.mxu0 0
    %55 = vmatpush.bf16.msra.mxu0 %v42
    %56 = vmatpush.bf16.msra.mxu0 %v41
    %57 = vmatmul.bf16.gmra.mxu0 %v47
    %v58 = vpop.f32.mrf.mxu0
    %v59 = vadd.f32 %v31, %v58
    %v60 = vpop.f32.mrf.mxu0
    %v61 = vadd.f32 %v31, %v60
    %62 = vdwg.mxu0
    %63 = vxpose.xlu0.b32.start [1/16] %v59, 128
    %64 = vxpose.xlu0.b32.cont [2/16] %v61, 128
    %65 = vxpose.xlu0.b32.cont [3/16] 0.0, 128
    %66 = vxpose.xlu0.b32.cont [4/16] 0.0, 128
    %67 = vxpose.xlu0.b32.cont [5/16] 0.0, 128
    %68 = vxpose.xlu0.b32.cont [6/16] 0.0, 128
    %69 = vxpose.xlu0.b32.cont [7/16] 0.0, 128
    %70 = vxpose.xlu0.b32.cont [8/16] 0.0, 128
    %71 = vxpose.xlu0.b32.cont [9/16] 0.0, 128
    %72 = vxpose.xlu0.b32.cont [10/16] 0.0, 128
    %73 = vxpose.xlu0.b32.cont [11/16] 0.0, 128
    %74 = vxpose.xlu0.b32.cont [12/16] 0.0, 128
    %75 = vxpose.xlu0.b32.cont [13/16] 0.0, 128
    %76 = vxpose.xlu0.b32.cont [14/16] 0.0, 128
    %77 = vxpose.xlu0.b32.cont [15/16] 0.0, 128
    %78 = vxpose.xlu0.b32.end [16/16] 0.0, 128
    %v79 = vpop.trf.xlu0
    %v80 = vpop.trf.xlu0
    %v81 = vpop.trf.xlu0
    %v82 = vpop.trf.xlu0
    %v83 = vpop.trf.xlu0
    %v84 = vpop.trf.xlu0
    %v85 = vpop.trf.xlu0
    %v86 = vpop.trf.xlu0
    %v87 = vpop.trf.xlu0
    %v88 = vpop.trf.xlu0
    %v89 = vpop.trf.xlu0
    %v90 = vpop.trf.xlu0
    %v91 = vpop.trf.xlu0
    %v92 = vpop.trf.xlu0
    %v93 = vpop.trf.xlu0
    %v94 = vpop.trf.xlu0
    %v95 = vmax.f32 %v80, 0.0
    %v96 = vand.u32 2147483647, %v80
    %v97 = vsub.f32 0.0, %v96
    %v98 = vmul.f32 %v97, 1.442695
    %v99 = vpow.pop %v98
    %v100 = vadd.f32 %v99, 1.0
    %v101 = vlog2.pop %v100
    %v102 = vmul.f32 %v101, 0.6931472
    %v103 = vadd.f32 %v95, %v102
    %v104 = vld [vmem:[%s3] sm:$0xff]
    %v105 = vmul.f32 %v104, %v103
    %v106 = vadd.f32 %v79, %v105
    %v107 = vlaneseq
    %v108 = vshrl.u32 %v107, 7
    %vm109 = vcmask 130048
    %v110 = vsel %vm109, %v106, -inf
    %v111 = vrot.slane %v110, 4
    %v112 = vmax.f32 %v110, %v111
    %v113 = vrot.slane %v112, 2
    %v114 = vmax.f32 %v112, %v113
    %v115 = vrot.slane %v114, 1
    %v116 = vmax.f32 %v114, %v115
    %vm117 = vcmp.eq.f32.partialorder %v106, %v116
    %v118 = vsel %vm117, %v108, 8
    %v119 = vsel %vm109, %v118, 2147483647
    %v120 = vrot.slane %v119, 4
    %vm121 = vcmp.lt.s32.totalorder %v119, %v120
    %v122 = vsel %vm121, %v119, %v120
    %v123 = vrot.slane %v122, 2
    %vm124 = vcmp.lt.s32.totalorder %v122, %v123
    %v125 = vsel %vm124, %v122, %v123
    %v126 = vrot.slane %v125, 1
    %vm127 = vcmp.lt.s32.totalorder %v125, %v126
    %v128 = vsel %vm127, %v125, %v126
    %vm129 = vcmp.eq.s32.totalorder %v108, %v128
    %v130 = vsel %vm129, -inf, %v106
    %v131 = vsel %vm109, %v130, -inf
    %v132 = vrot.slane %v131, 4
    %v133 = vmax.f32 %v131, %v132
    %v134 = vrot.slane %v133, 2
    %v135 = vmax.f32 %v133, %v134
    %v136 = vrot.slane %v135, 1
    %v137 = vmax.f32 %v135, %v136
    %vm138 = vcmp.eq.f32.partialorder %v130, %v137
    %v139 = vsel %vm138, %v108, 8
    %v140 = vsel %vm109, %v139, 2147483647
    %v141 = vrot.slane %v140, 4
    %vm142 = vcmp.lt.s32.totalorder %v140, %v141
    %v143 = vsel %vm142, %v140, %v141
    %v144 = vrot.slane %v143, 2
    %vm145 = vcmp.lt.s32.totalorder %v143, %v144
    %v146 = vsel %vm145, %v143, %v144
    %v147 = vrot.slane %v146, 1
    %vm148 = vcmp.lt.s32.totalorder %v146, %v147
    %v149 = vsel %vm148, %v146, %v147
    %vm150 = vcmp.eq.s32.totalorder %v108, %v149
    %vm151 = vmor %vm129, %vm150
    %v152 = vsub.f32 %v106, %v116
    %v153 = vmul.f32 %v152, 1.442695
    %v154 = vpow.pop %v153
    %v155 = vsel %vm151, %v154, 0.0
    %v156 = vsel %vm109, %v155, 0.0
    %v157 = vrot.slane %v156, 4
    %v158 = vadd.f32 %v156, %v157
    %v159 = vrot.slane %v158, 2
    %v160 = vadd.f32 %v158, %v159
    %v161 = vrot.slane %v160, 1
    %v162 = vadd.f32 %v160, %v161
    %v163 = vrcp.pop %v162
    %v164 = vmul.f32 %v162, %v163
    %v165 = vsub.f32 1.0, %v164
    %v166 = vmul.f32 %v163, %v165
    %v167 = vadd.f32 %v163, %v166
    %vm168 = vweird.f32 %v162
    %vm169 = vweird.f32 %v163
    %vm170 = vmor %vm168, %vm169
    %v171 = vsel %vm170, %v163, %v167
    %v172 = vand.u32 2147483647, %v162
    %vm173 = vcmp.eq.f32.partialorder %v172, 8.507059e+37
    %v174 = vand.u32 %v162, 2147483648
    %v175 = vor.u32 1.1754944e-38, %v174
    %v176 = vsel %vm173, %v175, %v171
    %v177 = vmul.f32 %v155, %v176
    %178 = vst.msk [vmem:[#allocation2] sm:$0xff] %vm109, %v177
    %vm179 = vcmp.eq.s32.totalorder %v108, 0
    %v180 = vsel %vm179, %v128, 0
    %vm181 = vcmp.eq.s32.totalorder %v108, 1
    %v182 = vsel %vm181, %v149, %v180
    %vm183 = vcmask 123904
    %184 = vst.msk [vmem:[#allocation4] sm:$0x3] %vm183, %v182
    // Predicated region
    $region18: #{tpu_custom_call.1} parent=1 // pred_check
      _
    $region19: #{tpu_custom_call.1} parent=1 // pred_check_branch
      %186 = sbr.rel (0) target = $region21
    $region20: #{tpu_custom_call.1} parent=1 // pred_region
      %188 = vsyncadd [#allocation3], 0
      %s190 = sshll.u32 [#allocation2], 4
      %s191 = int_to_ptr.vmem [resolvable:$true] %s190
      %s192 = sshll.u32 %s4, 4
      %s193 = int_to_ptr.hbm [resolvable:$true] %s192
      %195 = dma.vmem_to_hbm [thread:$0]  %s191, 128, %s193, [#allocation3]
    $region21: #{tpu_custom_call.1} parent=1 // pred_fallthru
      _
    // Predicated region
    $region22: #{tpu_custom_call.1} parent=1 // pred_check
      _
    $region23: #{tpu_custom_call.1} parent=1 // pred_check_branch
      %197 = sbr.rel (0) target = $region25
    $region24: #{tpu_custom_call.1} parent=1 // pred_region
      %199 = vsyncadd [#allocation5], 0
      %s201 = sshll.u32 [#allocation4], 4
      %s202 = int_to_ptr.vmem [resolvable:$true] %s201
      %s203 = sshll.u32 %s5, 4
      %s204 = int_to_ptr.hbm [resolvable:$true] %s203
      %206 = dma.vmem_to_hbm [thread:$0]  %s202, 32, %s204, [#allocation5]
    $region25: #{tpu_custom_call.1} parent=1 // pred_fallthru
      _
    // Predicated region
    $region26: #{tpu_custom_call.1} parent=1 // pred_check
      _
    $region27: #{tpu_custom_call.1} parent=1 // pred_check_branch
      %208 = sbr.rel (0) target = $region29
    $region28: #{tpu_custom_call.1} parent=1 // pred_region
      %210 = dma.done [#allocation3], 128
    $region29: #{tpu_custom_call.1} parent=1 // pred_fallthru
      _
    // Predicated region
    $region30: #{tpu_custom_call.1} parent=1 // pred_check
      _
    $region31: #{tpu_custom_call.1} parent=1 // pred_check_branch
      %212 = sbr.rel (0) target = $region33
    $region32: #{tpu_custom_call.1} parent=1 // pred_region
      %214 = dma.done [#allocation5], 32
    $region33: #{tpu_custom_call.1} parent=1 // pred_fallthru
      _
    %215 = vsyncpa [#allocation3], 1
    %216 = vsyncpa [#allocation5], 1

</llo_original>
